<compile_context>
chip_gen: v6e
topology: v6e:2x2x1
jax: 0.10.0
libtpu: 0.0.40
codegen_flags: <defaults>
</compile_context>

<pallas_src>
import functools

import jax
import jax.numpy as jnp
from jax.experimental import pallas as pl
from jax.experimental.pallas import tpu as pltpu


def _mlp_kernel(x_ref, w1_ref, b1_ref, w2_ref, b2_ref, w3_ref, b3_ref, o_ref):
    """Fused forward for one batch tile.

    x arrives in f32 and is cast to the weight dtype (bf16) in-register right
    before the first MXU matmul.  Matmuls accumulate in f32; bias-add / ReLU
    happen in f32 (v5e has no bf16 VPU), then cast back for the next matmul.
    """
    x = x_ref[...].astype(w1_ref.dtype)                              # f32 -> bf16 on VPU
    h1 = jnp.dot(x, w1_ref[...], preferred_element_type=jnp.float32)
    h1 = jnp.maximum(h1 + b1_ref[...], 0.0).astype(w2_ref.dtype)     # f32 bias + ReLU
    h2 = jnp.dot(h1, w2_ref[...], preferred_element_type=jnp.float32)
    h2 = jnp.maximum(h2 + b2_ref[...], 0.0).astype(w3_ref.dtype)
    y = jnp.dot(h2, w3_ref[...], preferred_element_type=jnp.float32) + b3_ref[...]
    o_ref[...] = y.astype(o_ref.dtype)


def _num_tensorcores():
    """Best-effort TensorCore-per-chip count (v7x = 2, v5e/v6e = 1)."""
    try:
        info = pltpu.get_tpu_info()
        for attr in ("num_cores", "tensor_cores_per_chip", "num_tensorcores",
                     "cores_per_chip"):
            v = getattr(info, attr, None)
            if isinstance(v, int) and v > 0:
                return v
    except Exception:
        pass
    try:
        v = getattr(jax.devices()[0], "num_cores", None)
        if isinstance(v, int) and v > 0:
            return v
    except Exception:
        pass
    return 1


def prepare_params(params, compute_dtype=jnp.bfloat16):
    """One-time parameter prep: cast weights to the MXU compute dtype and
    biases to f32.  Do this once, not on every forward call."""
    return {
        "W1": params["W1"].astype(compute_dtype),
        "W2": params["W2"].astype(compute_dtype),
        "W3": params["W3"].astype(compute_dtype),
        "b1": params["b1"].astype(jnp.float32),
        "b2": params["b2"].astype(jnp.float32),
        "b3": params["b3"].astype(jnp.float32),
    }


@functools.partial(jax.jit,
                   static_argnames=("batch_tile", "out_dtype", "num_cores"))
def delta_predictor_forward(x, prepared, *, batch_tile=1024,
                            out_dtype=jnp.float32, num_cores=1):
    """x: (B, input_dim) float32.  prepared: output of prepare_params()."""
    B, in_dim = x.shape
    w1, b1 = prepared["W1"], prepared["b1"]
    w2, b2 = prepared["W2"], prepared["b2"]
    w3, b3 = prepared["W3"], prepared["b3"]
    h1_dim, h2_dim, out_dim = w1.shape[1], w2.shape[1], w3.shape[1]

    pack = 8  # sublane granularity for the f32 x tile

    # --- Batch-tile selection -------------------------------------------
    tile = min(batch_tile, B)
    if num_cores > 1:
        # Multi-TC (v7x): aim for >= 2 grid steps per core so BlockSpec
        # double-buffering actually overlaps DMA with compute.
        target_steps = 2 * num_cores
        if B >= target_steps * pack:
            tile = min(tile, max(pack, (B // target_steps // pack) * pack))
    # Single-TC (v5e/v6e): keep grid=1 with the largest tile that fits.
    if tile < B:
        tile = max(pack, (tile // pack) * pack)

    # --- VMEM budget check (conservative: fits v7x's 64 MiB physical) ----
    def _bytes(a):
        return a.size * a.dtype.itemsize
    resident = 2 * (_bytes(w1) + _bytes(w2) + _bytes(w3)
                    + _bytes(b1) + _bytes(b2) + _bytes(b3))
    out_itemsize = jnp.dtype(out_dtype).itemsize

    def _fits(t):
        x_buf = 2 * t * in_dim * x.dtype.itemsize      # double-buffered x tile
        o_buf = 2 * t * out_dim * out_itemsize         # double-buffered out tile
        return resident + x_buf + o_buf <= 24 * 1024 * 1024

    while tile > pack and not _fits(tile):
        tile = max(pack, (tile // 2 // pack) * pack)

    grid = (pl.cdiv(B, tile),)  # partial last tile handled by Pallas (masked
                                # edge store; edge rows are row-independent).

    # Weights/biases: constant index_map -> same block stays resident in VMEM
    # across all grid steps (no per-step re-DMA).
    rep = lambda shape: pl.BlockSpec(shape, lambda i: (0, 0))

    out = pl.pallas_call(
        _mlp_kernel,
        out_shape=jax.ShapeDtypeStruct((B, out_dim), out_dtype),
        grid=grid,
        in_specs=[
            pl.BlockSpec((tile, in_dim), lambda i: (i, 0)),   # x batch tile (f32)
            rep((in_dim, h1_dim)), rep((1, h1_dim)),
            rep((h1_dim, h2_dim)), rep((1, h2_dim)),
            rep((h2_dim, out_dim)), rep((1, out_dim)),
        ],
        out_specs=pl.BlockSpec((tile, out_dim), lambda i: (i, 0)),
        compiler_params=pltpu.CompilerParams(
            dimension_semantics=("parallel",),
            # Safe on all of v5e/v6e/v7x (v7x scoped default is 32 MiB of
            # 64 MiB physical); footprint is capped to 24 MiB above.
            vmem_limit_bytes=32 * 1024 * 1024,
        ),
    )(x, w1, b1, w2, b2, w3, b3)

    return out


def init_params(key, input_dim, hidden_dims, output_dim):
    """Deterministic init mirroring nn.Linear default (uniform +-1/sqrt(fan_in))."""
    dims = [input_dim, hidden_dims[0], hidden_dims[1], output_dim]
    params = {}
    for li in range(3):
        fan_in, fan_out = dims[li], dims[li + 1]
        key, kw, kb = jax.random.split(key, 3)
        bound = 1.0 / jnp.sqrt(fan_in)
        params[f"W{li+1}"] = jax.random.uniform(
            kw, (fan_in, fan_out), jnp.float32, -bound, bound)
        params[f"b{li+1}"] = jax.random.uniform(
            kb, (1, fan_out), jnp.float32, -bound, bound)
    return params


def _reference(x, prepared):
    """Pure-JAX reference mirroring the kernel's numerics (bf16 matmul inputs,
    f32 accumulation, f32 bias-add/ReLU)."""
    cd = prepared["W1"].dtype
    h1 = jnp.dot(x.astype(cd), prepared["W1"],
                 preferred_element_type=jnp.float32)
    h1 = jnp.maximum(h1 + prepared["b1"], 0.0).astype(cd)
    h2 = jnp.dot(h1, prepared["W2"], preferred_element_type=jnp.float32)
    h2 = jnp.maximum(h2 + prepared["b2"], 0.0).astype(cd)
    return jnp.dot(h2, prepared["W3"],
                   preferred_element_type=jnp.float32) + prepared["b3"]


if __name__ == "__main__":
    key = jax.random.PRNGKey(0)
    B, input_dim = 64, 32
    hidden_dims = (64, 32)
    output_dim = 16

    kx, kp = jax.random.split(key)
    x = jax.random.normal(kx, (B, input_dim), jnp.float32)
    params = init_params(kp, input_dim, hidden_dims, output_dim)
    prepared = prepare_params(params)                 # one-time cast to bf16/f32

    out = delta_predictor_forward(x, prepared, num_cores=_num_tensorcores())
    out = jax.block_until_ready(out)

    ref = _reference(x, prepared)
    assert out.shape == (B, output_dim)
    # NOTE: the kernel matches a bf16-matmul reference; vs. a pure-f32 PyTorch
    # nn.Linear it differs at ~bf16 relative precision (~1e-2) by design.
    assert jnp.allclose(out, ref, atol=1e-3, rtol=1e-3), "mismatch vs reference"
    print("KERNEL_OK")
</pallas_src>

<mosaic_0001>
module attributes {stable_mosaic.version = 11 : i64} {
  func.func @_mlp_kernel(%arg0: i32, %arg1: memref<64x32xf32, #tpu.memory_space<vmem>>, %arg2: memref<32x64xbf16, #tpu.memory_space<vmem>>, %arg3: memref<1x64xf32, #tpu.memory_space<vmem>>, %arg4: memref<64x32xbf16, #tpu.memory_space<vmem>>, %arg5: memref<1x32xf32, #tpu.memory_space<vmem>>, %arg6: memref<32x16xbf16, #tpu.memory_space<vmem>>, %arg7: memref<1x16xf32, #tpu.memory_space<vmem>>, %arg8: memref<64x16xf32, #tpu.memory_space<vmem>>) attributes {dimension_semantics = [#tpu.dimension_semantics<parallel>], iteration_bounds = array<i64: 1>, scalar_prefetch = 0 : i64, scratch_operands = 0 : i64, tpu.core_type = #tpu.core_type<tc>, window_params = [{transform_indices = @transform_0, window_bounds = array<i64: 64, 32>}, {pipeline_mode = #tpu.pipeline_mode<synchronous>, transform_indices = @transform_1, window_bounds = array<i64: 32, 64>}, {pipeline_mode = #tpu.pipeline_mode<synchronous>, transform_indices = @transform_2, window_bounds = array<i64: 1, 64>}, {pipeline_mode = #tpu.pipeline_mode<synchronous>, transform_indices = @transform_3, window_bounds = array<i64: 64, 32>}, {pipeline_mode = #tpu.pipeline_mode<synchronous>, transform_indices = @transform_4, window_bounds = array<i64: 1, 32>}, {pipeline_mode = #tpu.pipeline_mode<synchronous>, transform_indices = @transform_5, window_bounds = array<i64: 32, 16>}, {pipeline_mode = #tpu.pipeline_mode<synchronous>, transform_indices = @transform_6, window_bounds = array<i64: 1, 16>}, {transform_indices = @transform_7, window_bounds = array<i64: 64, 16>}]} {
    %c0 = arith.constant 0 : index
    %c0_0 = arith.constant 0 : index
    %0 = vector.load %arg1[%c0, %c0_0] : memref<64x32xf32, #tpu.memory_space<vmem>>, vector<64x32xf32>
    %1 = arith.truncf %0 : vector<64x32xf32> to vector<64x32xbf16>
    %c0_1 = arith.constant 0 : index
    %c0_2 = arith.constant 0 : index
    %2 = vector.load %arg2[%c0_1, %c0_2] : memref<32x64xbf16, #tpu.memory_space<vmem>>, vector<32x64xbf16>
    %cst = arith.constant dense<0.000000e+00> : vector<64x64xf32>
    %3 = tpu.matmul %1, %2, %cst {dimension_numbers = #tpu.dot_dimension_numbers<[1], [0], [0], [1], [0, 0, 1, 1], [], []>} : vector<64x32xbf16>, vector<32x64xbf16>, vector<64x64xf32> -> vector<64x64xf32>
    %c0_3 = arith.constant 0 : index
    %c0_4 = arith.constant 0 : index
    %4 = vector.load %arg3[%c0_3, %c0_4] : memref<1x64xf32, #tpu.memory_space<vmem>>, vector<1x64xf32>
    %5 = vector.broadcast %4 : vector<1x64xf32> to vector<64x64xf32>
    %6 = arith.addf %3, %5 : vector<64x64xf32>
    %cst_5 = arith.constant 0.000000e+00 : f32
    %7 = vector.broadcast %cst_5 : f32 to vector<64x64xf32>
    %8 = arith.maximumf %6, %7 : vector<64x64xf32>
    %9 = arith.truncf %8 : vector<64x64xf32> to vector<64x64xbf16>
    %c0_6 = arith.constant 0 : index
    %c0_7 = arith.constant 0 : index
    %10 = vector.load %arg4[%c0_6, %c0_7] : memref<64x32xbf16, #tpu.memory_space<vmem>>, vector<64x32xbf16>
    %cst_8 = arith.constant dense<0.000000e+00> : vector<64x32xf32>
    %11 = tpu.matmul %9, %10, %cst_8 {dimension_numbers = #tpu.dot_dimension_numbers<[1], [0], [0], [1], [0, 0, 1, 1], [], []>} : vector<64x64xbf16>, vector<64x32xbf16>, vector<64x32xf32> -> vector<64x32xf32>
    %c0_9 = arith.constant 0 : index
    %c0_10 = arith.constant 0 : index
    %12 = vector.load %arg5[%c0_9, %c0_10] : memref<1x32xf32, #tpu.memory_space<vmem>>, vector<1x32xf32>
    %13 = vector.broadcast %12 : vector<1x32xf32> to vector<64x32xf32>
    %14 = arith.addf %11, %13 : vector<64x32xf32>
    %cst_11 = arith.constant 0.000000e+00 : f32
    %15 = vector.broadcast %cst_11 : f32 to vector<64x32xf32>
    %16 = arith.maximumf %14, %15 : vector<64x32xf32>
    %17 = arith.truncf %16 : vector<64x32xf32> to vector<64x32xbf16>
    %c0_12 = arith.constant 0 : index
    %c0_13 = arith.constant 0 : index
    %18 = vector.load %arg6[%c0_12, %c0_13] : memref<32x16xbf16, #tpu.memory_space<vmem>>, vector<32x16xbf16>
    %cst_14 = arith.constant dense<0.000000e+00> : vector<64x16xf32>
    %19 = tpu.matmul %17, %18, %cst_14 {dimension_numbers = #tpu.dot_dimension_numbers<[1], [0], [0], [1], [0, 0, 1, 1], [], []>} : vector<64x32xbf16>, vector<32x16xbf16>, vector<64x16xf32> -> vector<64x16xf32>
    %c0_15 = arith.constant 0 : index
    %c0_16 = arith.constant 0 : index
    %20 = vector.load %arg7[%c0_15, %c0_16] : memref<1x16xf32, #tpu.memory_space<vmem>>, vector<1x16xf32>
    %21 = vector.broadcast %20 : vector<1x16xf32> to vector<64x16xf32>
    %22 = arith.addf %19, %21 : vector<64x16xf32>
    %c0_17 = arith.constant 0 : index
    %c0_18 = arith.constant 0 : index
    %23 = vector.load %arg8[%c0_17, %c0_18] : memref<64x16xf32, #tpu.memory_space<vmem>>, vector<64x16xf32>
    tpu.vector_store %arg8[%c0_17, %c0_18], %22 {strides = array<i32>} : memref<64x16xf32, #tpu.memory_space<vmem>>, vector<64x16xf32>,
    return
  }
  func.func @transform_0(%arg0: i32) -> (i32, i32) {
    %c0_i32 = arith.constant 0 : i32
    %c0_i32_0 = arith.constant 0 : i32
    return %arg0, %c0_i32 : i32, i32
  }
  func.func @transform_1(%arg0: i32) -> (i32, i32) {
    %c0_i32 = arith.constant 0 : i32
    %c0_i32_0 = arith.constant 0 : i32
    %c0_i32_1 = arith.constant 0 : i32
    return %c0_i32, %c0_i32_0 : i32, i32
  }
  func.func @transform_2(%arg0: i32) -> (i32, i32) {
    %c0_i32 = arith.constant 0 : i32
    %c0_i32_0 = arith.constant 0 : i32
    %c0_i32_1 = arith.constant 0 : i32
    return %c0_i32, %c0_i32_0 : i32, i32
  }
  func.func @transform_3(%arg0: i32) -> (i32, i32) {
    %c0_i32 = arith.constant 0 : i32
    %c0_i32_0 = arith.constant 0 : i32
    %c0_i32_1 = arith.constant 0 : i32
    return %c0_i32, %c0_i32_0 : i32, i32
  }
  func.func @transform_4(%arg0: i32) -> (i32, i32) {
    %c0_i32 = arith.constant 0 : i32
    %c0_i32_0 = arith.constant 0 : i32
    %c0_i32_1 = arith.constant 0 : i32
    return %c0_i32, %c0_i32_0 : i32, i32
  }
  func.func @transform_5(%arg0: i32) -> (i32, i32) {
    %c0_i32 = arith.constant 0 : i32
    %c0_i32_0 = arith.constant 0 : i32
    %c0_i32_1 = arith.constant 0 : i32
    return %c0_i32, %c0_i32_0 : i32, i32
  }
  func.func @transform_6(%arg0: i32) -> (i32, i32) {
    %c0_i32 = arith.constant 0 : i32
    %c0_i32_0 = arith.constant 0 : i32
    %c0_i32_1 = arith.constant 0 : i32
    return %c0_i32, %c0_i32_0 : i32, i32
  }
  func.func @transform_7(%arg0: i32) -> (i32, i32) {
    %c0_i32 = arith.constant 0 : i32
    %c0_i32_0 = arith.constant 0 : i32
    return %arg0, %c0_i32 : i32, i32
  }
}

</mosaic_0001>

<llo_original>
// kernel: delta_predictor_forward.1
$region0: #{delta_predictor_forward.1}
  #allocation0 [shape = 'u32[]', space=smem, size = 0x4, offset = 0x4, fixed_abs, tag = 'smem constant byte address 0x4 - core index']
  #allocation1 [shape = 'u32[144,128]{1,0:T(1,128)}', space=vmem, size = 0x12000, scoped, tag = 'internal scratch']
  %s0 = inlined_call_operand.vmem [shape: f32[64,32], index: 0, kind: input, shape index: {}]
  %s1 = inlined_call_operand.vmem [shape: bf16[32,64], index: 1, kind: input, shape index: {}]
  %s2 = inlined_call_operand.vmem [shape: f32[1,64], index: 2, kind: input, shape index: {}]
  %s3 = inlined_call_operand.vmem [shape: bf16[64,32], index: 3, kind: input, shape index: {}]
  %s4 = inlined_call_operand.vmem [shape: f32[1,32], index: 4, kind: input, shape index: {}]
  %s5 = inlined_call_operand.vmem [shape: bf16[32,16], index: 5, kind: input, shape index: {}]
  %s6 = inlined_call_operand.vmem [shape: f32[1,16], index: 6, kind: input, shape index: {}]
  %s7 = inlined_call_operand.vmem [shape: f32[64,16], index: 7, kind: output, shape index: {}]
  %s8 = sld [smem:[#allocation0]]
  $region38: #{delta_predictor_forward.1} parent=0
    _
  %s10 = ssub.s32 1, %s8
  %s11 = scalar_select 0, %s10, %s8
  // Predicated region
  $region2: #{delta_predictor_forward.1} parent=0 // pred_check
    _
  $region3: #{delta_predictor_forward.1} parent=0 // pred_check_branch
    %13 = sbr.rel (0) target = $region5
  $region4: #{delta_predictor_forward.1} parent=0 // pred_region
    _
  $region5: #{delta_predictor_forward.1} parent=0 // pred_fallthru
    _
  // Predicated region
  $region6: #{delta_predictor_forward.1} parent=0 // pred_check
    _
  $region7: #{delta_predictor_forward.1} parent=0 // pred_check_branch
    %15 = sbr.rel (0) target = $region9
  $region8: #{delta_predictor_forward.1} parent=0 // pred_region
    _
  $region9: #{delta_predictor_forward.1} parent=0 // pred_fallthru
    _
  // Predicated region
  $region10: #{delta_predictor_forward.1} parent=0 // pred_check
    _
  $region11: #{delta_predictor_forward.1} parent=0 // pred_check_branch
    %17 = sbr.rel (0) target = $region13
  $region12: #{delta_predictor_forward.1} parent=0 // pred_region
    _
  $region13: #{delta_predictor_forward.1} parent=0 // pred_fallthru
    _
  // Predicated region
  $region14: #{delta_predictor_forward.1} parent=0 // pred_check
    _
  $region15: #{delta_predictor_forward.1} parent=0 // pred_check_branch
    %19 = sbr.rel (0) target = $region17
  $region16: #{delta_predictor_forward.1} parent=0 // pred_region
    _
  $region17: #{delta_predictor_forward.1} parent=0 // pred_fallthru
    _
  // Predicated region
  $region18: #{delta_predictor_forward.1} parent=0 // pred_check
    _
  $region19: #{delta_predictor_forward.1} parent=0 // pred_check_branch
    %21 = sbr.rel (0) target = $region21
  $region20: #{delta_predictor_forward.1} parent=0 // pred_region
    _
  $region21: #{delta_predictor_forward.1} parent=0 // pred_fallthru
    _
  // Predicated region
  $region22: #{delta_predictor_forward.1} parent=0 // pred_check
    _
  $region23: #{delta_predictor_forward.1} parent=0 // pred_check_branch
    %23 = sbr.rel (0) target = $region25
  $region24: #{delta_predictor_forward.1} parent=0 // pred_region
    _
  $region25: #{delta_predictor_forward.1} parent=0 // pred_fallthru
    _
  // Predicated region
  $region26: #{delta_predictor_forward.1} parent=0 // pred_check
    _
  $region27: #{delta_predictor_forward.1} parent=0 // pred_check_branch
    %25 = sbr.rel (0) target = $region29
  $region28: #{delta_predictor_forward.1} parent=0 // pred_region
    _
  $region29: #{delta_predictor_forward.1} parent=0 // pred_fallthru
    _
  %v27 = vld [vmem:[%s0] sm:$0xff]
  %v28 = vld [vmem:[%s0 + $0x8] sm:$0xff]
  %v29 = vld [vmem:[%s0 + $0x10] sm:$0xff]
  %v30 = vld [vmem:[%s0 + $0x18] sm:$0xff]
  %v31 = vld [vmem:[%s0 + $0x20] sm:$0xff]
  %v32 = vld [vmem:[%s0 + $0x28] sm:$0xff]
  %v33 = vld [vmem:[%s0 + $0x30] sm:$0xff]
  %v34 = vld [vmem:[%s0 + $0x38] sm:$0xff]
  %v35 = vpack.c.bf16 %v28, %v27
  %v36 = vpack.c.bf16 %v30, %v29
  %v37 = vpack.c.bf16 %v32, %v31
  %v38 = vpack.c.bf16 %v34, %v33
  %v39 = vld [vmem:[%s1] sm:$0xf]
  %v40 = vld [vmem:[%s1 + $0x4] sm:$0xf]
  %v41 = vld [vmem:[%s1 + $0x8] sm:$0xf]
  %v42 = vld [vmem:[%s1 + $0xc] sm:$0xf]
  %v43 = vld [vmem:[%s2] sm:$0x1]
  %v45 = vlaneseq
  %v46 = vshrl.u32 %v45, 7
  %v47 = vsub.s32 0, %v46
  %v48 = vrot.slane %v43, %v47
  %v54 = vunpack.c.l.b16 %v39
  %v55 = vunpack.c.l.b16 %v40
  %v56 = vunpack.c.l.b16 %v41
  %v57 = vunpack.c.l.b16 %v42
  %v58 = vpack.c.b16 %v55, %v54
  %v59 = vpack.c.b16 %v57, %v56
  %vm62 = vcmask 261120
  %v64 = vsel %vm62, %v35, 0
  %v67 = vsel %vm62, %v36, 0
  %v70 = vsel %vm62, %v37, 0
  %v73 = vsel %vm62, %v38, 0
  %75 = vmatprep.subr.bf16.mxu0 0
  %76 = vmatpush1.bf16.msra.mxu0 0
  %77 = vmatprep.subr.bf16.mxu0 0
  %78 = vmatpush1.bf16.msra.mxu0 0
  %79 = vmatprep.subr.bf16.mxu0 0
  %80 = vmatpush1.bf16.msra.mxu0 0
  %81 = vmatprep.subr.bf16.mxu0 0
  %82 = vmatpush1.bf16.msra.mxu0 0
  %83 = vmatprep.subr.bf16.mxu0 0
  %84 = vmatpush1.bf16.msra.mxu0 0
  %85 = vmatprep.subr.bf16.mxu0 0
  %86 = vmatpush1.bf16.msra.mxu0 0
  %87 = vmatprep.subr.bf16.mxu0 0
  %88 = vmatpush1.bf16.msra.mxu0 %v59
  %89 = vmatprep.subr.bf16.mxu0 0
  %90 = vmatpush1.bf16.msra.mxu0 %v58
  %91 = vmatprep.subr.bf16.mxu0 0
  %92 = vmatpush2.bf16.msra.mxu0 0
  %93 = vmatprep.subr.bf16.mxu0 0
  %94 = vmatpush2.bf16.msra.mxu0 0
  %95 = vmatprep.subr.bf16.mxu0 0
  %96 = vmatpush2.bf16.msra.mxu0 0
  %97 = vmatprep.subr.bf16.mxu0 0
  %98 = vmatpush2.bf16.msra.mxu0 0
  %99 = vmatprep.subr.bf16.mxu0 0
  %100 = vmatpush2.bf16.msra.mxu0 0
  %101 = vmatprep.subr.bf16.mxu0 0
  %102 = vmatpush2.bf16.msra.mxu0 0
  %103 = vmatprep.subr.bf16.mxu0 0
  %104 = vmatpush2.bf16.msra.mxu0 0
  %105 = vmatprep.subr.bf16.mxu0 0
  %106 = vmatpush2.bf16.msra.mxu0 0
  %107 = vmatprep.mubr.bf16.mxu0 0
  %108 = vmatmul.mubr.bf16.gmra.mxu0 %v64
  %v109 = vpop.f32.mrf.mxu0
  %v110 = vadd.f32 %v48, %v109
  %v111 = vpop.f32.mrf.mxu0
  %v112 = vpop.f32.mrf.mxu0
  %v113 = vadd.f32 %v48, %v112
  %v114 = vpop.f32.mrf.mxu0
  %115 = vmatprep.mubr.bf16.mxu0 0
  %116 = vmatmul.mubr.bf16.gmra.mxu0 %v67
  %v117 = vpop.f32.mrf.mxu0
  %v118 = vadd.f32 %v48, %v117
  %v119 = vpop.f32.mrf.mxu0
  %v120 = vpop.f32.mrf.mxu0
  %v121 = vadd.f32 %v48, %v120
  %v122 = vpop.f32.mrf.mxu0
  %123 = vmatprep.mubr.bf16.mxu0 0
  %124 = vmatmul.mubr.bf16.gmra.mxu0 %v70
  %v125 = vpop.f32.mrf.mxu0
  %v126 = vadd.f32 %v48, %v125
  %v127 = vpop.f32.mrf.mxu0
  %v128 = vpop.f32.mrf.mxu0
  %v129 = vadd.f32 %v48, %v128
  %v130 = vpop.f32.mrf.mxu0
  %131 = vmatprep.mubr.bf16.mxu0 0
  %132 = vmatmul.mubr.bf16.gmra.mxu0 %v73
  %v133 = vpop.f32.mrf.mxu0
  %v134 = vadd.f32 %v48, %v133
  %v135 = vpop.f32.mrf.mxu0
  %v136 = vpop.f32.mrf.mxu0
  %v137 = vadd.f32 %v48, %v136
  %v138 = vpop.f32.mrf.mxu0
  %139 = vdwg.mxu0
  %v140 = vmax.f32 %v110, 0.0
  %v141 = vmax.f32 %v113, 0.0
  %v142 = vmax.f32 %v118, 0.0
  %v143 = vmax.f32 %v121, 0.0
  %v144 = vmax.f32 %v126, 0.0
  %v145 = vmax.f32 %v129, 0.0
  %v146 = vmax.f32 %v134, 0.0
  %v147 = vmax.f32 %v137, 0.0
  %v148 = vpack.c.bf16 %v141, %v140
  %v149 = vpack.c.bf16 %v143, %v142
  %v150 = vpack.c.bf16 %v145, %v144
  %v151 = vpack.c.bf16 %v147, %v146
  %v152 = vld [vmem:[%s3] sm:$0xf]
  %v153 = vld [vmem:[%s3 + $0x4] sm:$0xf]
  %v154 = vld [vmem:[%s3 + $0x8] sm:$0xf]
  %v155 = vld [vmem:[%s3 + $0xc] sm:$0xf]
  %v156 = vld [vmem:[%s3 + $0x10] sm:$0xf]
  %v157 = vld [vmem:[%s3 + $0x14] sm:$0xf]
  %v158 = vld [vmem:[%s3 + $0x18] sm:$0xf]
  %v159 = vld [vmem:[%s3 + $0x1c] sm:$0xf]
  %v160 = vld [vmem:[%s4] sm:$0x1]
  %v162 = vlaneseq
  %v163 = vshrl.u32 %v162, 7
  %v164 = vsub.s32 0, %v163
  %v165 = vrot.slane %v160, %v164
  %v175 = vunpack.c.l.b16 %v152
  %v176 = vunpack.c.l.b16 %v153
  %v177 = vunpack.c.l.b16 %v154
  %v178 = vunpack.c.l.b16 %v155
  %v179 = vunpack.c.l.b16 %v156
  %v180 = vunpack.c.l.b16 %v157
  %v181 = vunpack.c.l.b16 %v158
  %v182 = vunpack.c.l.b16 %v159
  %v183 = vpack.c.b16 %v176, %v175
  %v184 = vpack.c.b16 %v178, %v177
  %v185 = vpack.c.b16 %v180, %v179
  %v186 = vpack.c.b16 %v182, %v181
  %vm191 = vcmask 523264
  %v193 = vsel %vm191, %v148, 0
  %v196 = vsel %vm191, %v149, 0
  %v199 = vsel %vm191, %v150, 0
  %v202 = vsel %vm191, %v151, 0
  %204 = vmatprep.subr.bf16.mxu0 0
  %205 = vmatpush1.bf16.msra.mxu0 0
  %206 = vmatprep.subr.bf16.mxu0 0
  %207 = vmatpush1.bf16.msra.mxu0 0
  %208 = vmatprep.subr.bf16.mxu0 0
  %209 = vmatpush1.bf16.msra.mxu0 0
  %210 = vmatprep.subr.bf16.mxu0 0
  %211 = vmatpush1.bf16.msra.mxu0 0
  %212 = vmatprep.subr.bf16.mxu0 0
  %213 = vmatpush1.bf16.msra.mxu0 %v186
  %214 = vmatprep.subr.bf16.mxu0 0
  %215 = vmatpush1.bf16.msra.mxu0 %v185
  %216 = vmatprep.subr.bf16.mxu0 0
  %217 = vmatpush1.bf16.msra.mxu0 %v184
  %218 = vmatprep.subr.bf16.mxu0 0
  %219 = vmatpush1.bf16.msra.mxu0 %v183
  %220 = vmatprep.subr.bf16.mxu0 0
  %221 = vmatpush2.bf16.msra.mxu0 0
  %222 = vmatprep.subr.bf16.mxu0 0
  %223 = vmatpush2.bf16.msra.mxu0 0
  %224 = vmatprep.subr.bf16.mxu0 0
  %225 = vmatpush2.bf16.msra.mxu0 0
  %226 = vmatprep.subr.bf16.mxu0 0
  %227 = vmatpush2.bf16.msra.mxu0 0
  %228 = vmatprep.subr.bf16.mxu0 0
  %229 = vmatpush2.bf16.msra.mxu0 0
  %230 = vmatprep.subr.bf16.mxu0 0
  %231 = vmatpush2.bf16.msra.mxu0 0
  %232 = vmatprep.subr.bf16.mxu0 0
  %233 = vmatpush2.bf16.msra.mxu0 0
  %234 = vmatprep.subr.bf16.mxu0 0
  %235 = vmatpush2.bf16.msra.mxu0 0
  %236 = vmatprep.mubr.bf16.mxu0 0
  %237 = vmatmul.mubr.bf16.gmra.mxu0 %v193
  %v238 = vpop.f32.mrf.mxu0
  %v239 = vadd.f32 %v165, %v238
  %v240 = vpop.f32.mrf.mxu0
  %v241 = vpop.f32.mrf.mxu0
  %v242 = vadd.f32 %v165, %v241
  %v243 = vpop.f32.mrf.mxu0
  %244 = vmatprep.mubr.bf16.mxu0 0
  %245 = vmatmul.mubr.bf16.gmra.mxu0 %v196
  %v246 = vpop.f32.mrf.mxu0
  %v247 = vadd.f32 %v165, %v246
  %v248 = vpop.f32.mrf.mxu0
  %v249 = vpop.f32.mrf.mxu0
  %v250 = vadd.f32 %v165, %v249
  %v251 = vpop.f32.mrf.mxu0
  %252 = vmatprep.mubr.bf16.mxu0 0
  %253 = vmatmul.mubr.bf16.gmra.mxu0 %v199
  %v254 = vpop.f32.mrf.mxu0
  %v255 = vadd.f32 %v165, %v254
  %v256 = vpop.f32.mrf.mxu0
  %v257 = vpop.f32.mrf.mxu0
  %v258 = vadd.f32 %v165, %v257
  %v259 = vpop.f32.mrf.mxu0
  %260 = vmatprep.mubr.bf16.mxu0 0
  %261 = vmatmul.mubr.bf16.gmra.mxu0 %v202
  %v262 = vpop.f32.mrf.mxu0
  %v263 = vadd.f32 %v165, %v262
  %v264 = vpop.f32.mrf.mxu0
  %v265 = vpop.f32.mrf.mxu0
  %v266 = vadd.f32 %v165, %v265
  %v267 = vpop.f32.mrf.mxu0
  %268 = vdwg.mxu0
  %v269 = vmax.f32 %v239, 0.0
  %v270 = vmax.f32 %v242, 0.0
  %v271 = vmax.f32 %v247, 0.0
  %v272 = vmax.f32 %v250, 0.0
  %v273 = vmax.f32 %v255, 0.0
  %v274 = vmax.f32 %v258, 0.0
  %v275 = vmax.f32 %v263, 0.0
  %v276 = vmax.f32 %v266, 0.0
  %v277 = vpack.c.bf16 %v270, %v269
  %v278 = vpack.c.bf16 %v272, %v271
  %v279 = vpack.c.bf16 %v274, %v273
  %v280 = vpack.c.bf16 %v276, %v275
  %v281 = vld [vmem:[%s5] sm:$0xf]
  %v282 = vld [vmem:[%s5 + $0x4] sm:$0xf]
  %v283 = vld [vmem:[%s5 + $0x8] sm:$0xf]
  %v284 = vld [vmem:[%s5 + $0xc] sm:$0xf]
  %v285 = vld [vmem:[%s6] sm:$0x1]
  %v287 = vlaneseq
  %v288 = vshrl.u32 %v287, 7
  %v289 = vsub.s32 0, %v288
  %v290 = vrot.slane %v285, %v289
  %v296 = vunpack.c.l.b16 %v281
  %v297 = vunpack.c.l.b16 %v282
  %v298 = vunpack.c.l.b16 %v283
  %v299 = vunpack.c.l.b16 %v284
  %v300 = vpack.c.b16 %v297, %v296
  %v301 = vpack.c.b16 %v299, %v298
  %v305 = vsel %vm62, %v277, 0
  %v308 = vsel %vm62, %v278, 0
  %v311 = vsel %vm62, %v279, 0
  %v314 = vsel %vm62, %v280, 0
  %316 = vmatprep.subr.bf16.mxu0 0
  %317 = vmatpush1.bf16.msra.mxu0 0
  %318 = vmatprep.subr.bf16.mxu0 0
  %319 = vmatpush1.bf16.msra.mxu0 0
  %320 = vmatprep.subr.bf16.mxu0 0
  %321 = vmatpush1.bf16.msra.mxu0 0
  %322 = vmatprep.subr.bf16.mxu0 0
  %323 = vmatpush1.bf16.msra.mxu0 0
  %324 = vmatprep.subr.bf16.mxu0 0
  %325 = vmatpush1.bf16.msra.mxu0 0
  %326 = vmatprep.subr.bf16.mxu0 0
  %327 = vmatpush1.bf16.msra.mxu0 0
  %328 = vmatprep.subr.bf16.mxu0 0
  %329 = vmatpush1.bf16.msra.mxu0 %v301
  %330 = vmatprep.subr.bf16.mxu0 0
  %331 = vmatpush1.bf16.msra.mxu0 %v300
  %332 = vmatprep.subr.bf16.mxu0 0
  %333 = vmatpush2.bf16.msra.mxu0 0
  %334 = vmatprep.subr.bf16.mxu0 0
  %335 = vmatpush2.bf16.msra.mxu0 0
  %336 = vmatprep.subr.bf16.mxu0 0
  %337 = vmatpush2.bf16.msra.mxu0 0
  %338 = vmatprep.subr.bf16.mxu0 0
  %339 = vmatpush2.bf16.msra.mxu0 0
  %340 = vmatprep.subr.bf16.mxu0 0
  %341 = vmatpush2.bf16.msra.mxu0 0
  %342 = vmatprep.subr.bf16.mxu0 0
  %343 = vmatpush2.bf16.msra.mxu0 0
  %344 = vmatprep.subr.bf16.mxu0 0
  %345 = vmatpush2.bf16.msra.mxu0 0
  %346 = vmatprep.subr.bf16.mxu0 0
  %347 = vmatpush2.bf16.msra.mxu0 0
  %348 = vmatprep.mubr.bf16.mxu0 0
  %349 = vmatmul.mubr.bf16.gmra.mxu0 %v305
  %v350 = vpop.f32.mrf.mxu0
  %v351 = vadd.f32 %v290, %v350
  %v352 = vpop.f32.mrf.mxu0
  %v353 = vpop.f32.mrf.mxu0
  %v354 = vadd.f32 %v290, %v353
  %v355 = vpop.f32.mrf.mxu0
  %356 = vmatprep.mubr.bf16.mxu0 0
  %357 = vmatmul.mubr.bf16.gmra.mxu0 %v308
  %v358 = vpop.f32.mrf.mxu0
  %v359 = vadd.f32 %v290, %v358
  %v360 = vpop.f32.mrf.mxu0
  %v361 = vpop.f32.mrf.mxu0
  %v362 = vadd.f32 %v290, %v361
  %v363 = vpop.f32.mrf.mxu0
  %364 = vmatprep.mubr.bf16.mxu0 0
  %365 = vmatmul.mubr.bf16.gmra.mxu0 %v311
  %v366 = vpop.f32.mrf.mxu0
  %v367 = vadd.f32 %v290, %v366
  %v368 = vpop.f32.mrf.mxu0
  %v369 = vpop.f32.mrf.mxu0
  %v370 = vadd.f32 %v290, %v369
  %v371 = vpop.f32.mrf.mxu0
  %372 = vmatprep.mubr.bf16.mxu0 0
  %373 = vmatmul.mubr.bf16.gmra.mxu0 %v314
  %v374 = vpop.f32.mrf.mxu0
  %v375 = vadd.f32 %v290, %v374
  %v376 = vpop.f32.mrf.mxu0
  %v377 = vpop.f32.mrf.mxu0
  %v378 = vadd.f32 %v290, %v377
  %v379 = vpop.f32.mrf.mxu0
  %380 = vdwg.mxu0
  %vm381 = vcmask 130048
  %382 = vst.msk [vmem:[%s7] sm:$0xff] %vm381, %v351
  %383 = vst.msk [vmem:[%s7 + $0x8] sm:$0xff] %vm381, %v354
  %384 = vst.msk [vmem:[%s7 + $0x10] sm:$0xff] %vm381, %v359
  %385 = vst.msk [vmem:[%s7 + $0x18] sm:$0xff] %vm381, %v362
  %386 = vst.msk [vmem:[%s7 + $0x20] sm:$0xff] %vm381, %v367
  %387 = vst.msk [vmem:[%s7 + $0x28] sm:$0xff] %vm381, %v370
  %388 = vst.msk [vmem:[%s7 + $0x30] sm:$0xff] %vm381, %v375
  %389 = vst.msk [vmem:[%s7 + $0x38] sm:$0xff] %vm381, %v378
  // Predicated region
  $region30: #{delta_predictor_forward.1} parent=0 // pred_check
    _
  $region31: #{delta_predictor_forward.1} parent=0 // pred_check_branch
    %391 = sbr.rel (0) target = $region33
  $region32: #{delta_predictor_forward.1} parent=0 // pred_region
    _
  $region33: #{delta_predictor_forward.1} parent=0 // pred_fallthru
    _
  // Predicated region
  $region34: #{delta_predictor_forward.1} parent=0 // pred_check
    _
  $region35: #{delta_predictor_forward.1} parent=0 // pred_check_branch
    %393 = sbr.rel (0) target = $region37
  $region36: #{delta_predictor_forward.1} parent=0 // pred_region
    _
  $region37: #{delta_predictor_forward.1} parent=0 // pred_fallthru
    _

</llo_original>
